<compile_context>
chip_gen: v7x
topology: tpu7x:2x2x1
jax: 0.10.0
libtpu: 0.0.40
codegen_flags: <defaults>
</compile_context>

<pallas_src>
import math

import jax
import jax.numpy as jnp
from jax import lax
from jax.experimental import pallas as pl
from jax.experimental.pallas import tpu as pltpu


# ----------------------------- small helpers ------------------------------- #
def _round_up(x, m):
    return (x + m - 1) // m * m


def _pick_row_tile(M, max_tile=512):
    """Largest row tile <= max_tile that still leaves >= 2 row tiles
    (so a 'parallel' row axis can be sharded across v7x's 2 TensorCores)."""
    for t in (512, 256, 128, 64, 32, 16, 8):
        if t <= max_tile and 2 * t <= M:
            return t
    return min(_round_up(max(M, 1), 8), max_tile)


def _vmem_limit_bytes():
    """~3/4 of physical VMEM: ~96 MiB on v5e/v6e, ~48 MiB on v7x."""
    cap = 64 * 1024 * 1024  # conservative fallback (v7x-sized)
    try:
        info = pltpu.get_tpu_info()
        cap = int(getattr(info, "vmem_capacity_bytes", cap) or cap)
    except Exception:
        pass
    return max(32 * 1024 * 1024, (cap * 3) // 4)


def _single_buffered_spec(block_shape, index_map):
    """BlockSpec for blocks whose index never changes: single-buffer them
    (Pallas double-buffers every input by default, doubling VMEM for no
    benefit).  Falls back to a plain spec if pipeline_mode is unavailable."""
    try:
        return pl.BlockSpec(block_shape, index_map, pipeline_mode=pl.Buffered(1))
    except Exception:
        return pl.BlockSpec(block_shape, index_map)


# ----------------------------- kernels ------------------------------------- #
def _embed_ids_gather_kernel(tok_ids, pos_ids, tok_hbm, pos_hbm, o_ref,
                             tok_buf, pos_buf, tok_sem, pos_sem):
    """Path A (general): per-row DMA gather of embedding rows.

    Token/position ids live in SMEM (scalar prefetch); both tables stay in
    HBM.  For each of the tm rows of this output tile we issue a (1, D)
    async copy into VMEM scratch, wait for all of them, then do one dense
    (tm, D) add + store.  Exact (no matmul involved)."""
    i = pl.program_id(0)
    tm = o_ref.shape[0]
    base = i * tm

    def issue(r, carry):
        t = tok_ids[base + r]
        p = pos_ids[base + r]
        pltpu.make_async_copy(tok_hbm.at[pl.ds(t, 1)],
                              tok_buf.at[pl.ds(r, 1)], tok_sem).start()
        pltpu.make_async_copy(pos_hbm.at[pl.ds(p, 1)],
                              pos_buf.at[pl.ds(r, 1)], pos_sem).start()
        return carry

    lax.fori_loop(0, tm, issue, 0)

    def drain(r, carry):
        # Dummy src slice: .wait() only needs the dst shape + semaphore.
        pltpu.make_async_copy(tok_hbm.at[pl.ds(0, 1)],
                              tok_buf.at[pl.ds(r, 1)], tok_sem).wait()
        pltpu.make_async_copy(pos_hbm.at[pl.ds(0, 1)],
                              pos_buf.at[pl.ds(r, 1)], pos_sem).wait()
        return carry

    lax.fori_loop(0, tm, drain, 0)

    o_ref[...] = (tok_buf[...] + pos_buf[...]).astype(o_ref.dtype)


def _embed_ids_onehot_kernel(tok_ref, pos_ref, w_ref, p_ref, o_ref):
    """Path A fast path (tiny tables only): one-hot matmul gather on the MXU
    against VMEM-resident tables.  Only used when (V*D + L*D)*4 is small, so
    the (tm, V) one-hot intermediate stays a few vregs."""
    tm = o_ref.shape[0]
    V = w_ref.shape[0]
    L = p_ref.shape[0]
    tok_oh = (tok_ref[...] ==
              lax.broadcasted_iota(jnp.int32, (tm, V), 1)).astype(w_ref.dtype)
    pos_oh = (pos_ref[...] ==
              lax.broadcasted_iota(jnp.int32, (tm, L), 1)).astype(p_ref.dtype)
    y = jnp.dot(tok_oh, w_ref[...], preferred_element_type=jnp.float32)
    y = y + jnp.dot(pos_oh, p_ref[...], preferred_element_type=jnp.float32)
    o_ref[...] = y.astype(o_ref.dtype)


def _soft_embed_kernel(x_ref, w_ref, pos_ref, p_ref, o_ref, acc_ref):
    """Path B: K-tiled (tm, tk) @ (tk, D) bf16 matmul with f32 accumulator.
    The accumulator is initialised with the fused positional embedding at
    k == 0 and written back at the last K step."""
    k = pl.program_id(1)

    @pl.when(k == 0)
    def _():
        tm = acc_ref.shape[0]
        L = p_ref.shape[0]
        pos_oh = (pos_ref[...] ==
                  lax.broadcasted_iota(jnp.int32, (tm, L), 1)).astype(p_ref.dtype)
        acc_ref[...] = jnp.dot(pos_oh, p_ref[...],
                               preferred_element_type=jnp.float32)

    # x_ref / w_ref are bf16 (cast in the wrapper) -> native MXU rate,
    # f32 accumulation here.
    acc_ref[...] += jnp.dot(x_ref[...], w_ref[...],
                            preferred_element_type=jnp.float32)

    @pl.when(k == pl.num_programs(1) - 1)
    def _():
        o_ref[...] = acc_ref[...].astype(o_ref.dtype)


# ----------------------------- wrappers ------------------------------------- #
def _embed_ids_gather(tok_ids, pos_ids, w, p):
    """(M,) int ids -> (M, D) = w[tok_ids] + p[pos_ids] via HBM row gather."""
    M = tok_ids.shape[0]
    V, D = w.shape
    # Moderate row tile: DMA issue is serial per row; 128 amortizes the
    # ~0.35us grid-step overhead without an excessive in-flight DMA count.
    tm = _pick_row_tile(M, max_tile=128)
    Mp = _round_up(M, tm)

    tok = tok_ids.astype(jnp.int32)
    pos = pos_ids.astype(jnp.int32)
    if Mp != M:
        tok = jnp.pad(tok, (0, Mp - M))   # padded rows gather row 0, sliced off
        pos = jnp.pad(pos, (0, Mp - M))

    out = pl.pallas_call(
        _embed_ids_gather_kernel,
        out_shape=jax.ShapeDtypeStruct((Mp, D), jnp.float32),
        grid_spec=pltpu.PrefetchScalarGridSpec(
            num_scalar_prefetch=2,                      # token ids, pos ids (SMEM)
            grid=(Mp // tm,),
            in_specs=[
                pl.BlockSpec(memory_space=pl.ANY),      # token table stays in HBM
                pl.BlockSpec(memory_space=pl.ANY),      # pos table stays in HBM
            ],
            out_specs=pl.BlockSpec((tm, D), lambda i, tok, pos: (i, 0)),
            scratch_shapes=[
                pltpu.VMEM((tm, D), jnp.float32),       # gathered token rows
                pltpu.VMEM((tm, D), jnp.float32),       # gathered pos rows
                pltpu.SemaphoreType.DMA(()),
                pltpu.SemaphoreType.DMA(()),
            ],
        ),
        compiler_params=pltpu.CompilerParams(
            dimension_semantics=("parallel",),
            vmem_limit_bytes=_vmem_limit_bytes(),
        ),
    )(tok, pos, w, p)
    return out[:M]


def _embed_ids_onehot(tok_ids, pos_ids, w, p):
    """Tiny-table fast path: one-hot matmul gather with resident tables."""
    M = tok_ids.shape[0]
    V, D = w.shape
    L = p.shape[0]
    tm = _pick_row_tile(M, max_tile=128)
    Mp = _round_up(M, tm)

    tok2 = tok_ids.reshape(M, 1).astype(jnp.int32)
    pos2 = pos_ids.reshape(M, 1).astype(jnp.int32)
    if Mp != M:
        tok2 = jnp.pad(tok2, ((0, Mp - M), (0, 0)))
        pos2 = jnp.pad(pos2, ((0, Mp - M), (0, 0)))

    out = pl.pallas_call(
        _embed_ids_onehot_kernel,
        out_shape=jax.ShapeDtypeStruct((Mp, D), jnp.float32),
        grid_spec=pltpu.PrefetchScalarGridSpec(
            num_scalar_prefetch=0,
            grid=(Mp // tm,),
            in_specs=[
                pl.BlockSpec((tm, 1), lambda i: (i, 0)),        # token ids
                pl.BlockSpec((tm, 1), lambda i: (i, 0)),        # position ids
                _single_buffered_spec((V, D), lambda i: (0, 0)),  # token table
                _single_buffered_spec((L, D), lambda i: (0, 0)),  # pos table
            ],
            out_specs=pl.BlockSpec((tm, D), lambda i: (i, 0)),
        ),
        compiler_params=pltpu.CompilerParams(
            dimension_semantics=("parallel",),
            vmem_limit_bytes=_vmem_limit_bytes(),
        ),
    )(tok2, pos2, w, p)
    return out[:M]


def _embed_ids(tok_ids, pos_ids, w, p, *, force_gather=False):
    """Dispatch path A: one-hot MXU gather only for tiny resident tables,
    otherwise the scalable HBM row-gather kernel."""
    V, D = w.shape
    table_bytes = (w.size + p.size) * w.dtype.itemsize
    small = (table_bytes <= 2 * 1024 * 1024) and (V <= 2048)
    if small and not force_gather:
        return _embed_ids_onehot(tok_ids, pos_ids, w, p)
    return _embed_ids_gather(tok_ids, pos_ids, w, p)


def _soft_embed(x2d, pos_ids, w, p):
    """x2d: (M, V), pos_ids: (M,) -> (M, D) = x2d @ w + p[pos_ids]."""
    M, V = x2d.shape
    D = w.shape[1]
    L = p.shape[0]
    tm = _pick_row_tile(M, max_tile=512)
    tk = min(512, _round_up(V, 128))
    Mp = _round_up(M, tm)
    Vp = _round_up(V, tk)          # zero-pad V instead of the old tk=V fallback

    # bf16 operands for the dominant HBM streams (f32 accumulate in-kernel).
    xb = x2d.astype(jnp.bfloat16)
    wb = w.astype(jnp.bfloat16)
    pos2 = pos_ids.reshape(M, 1).astype(jnp.int32)
    if Mp != M or Vp != V:
        xb = jnp.pad(xb, ((0, Mp - M), (0, Vp - V)))
    if Vp != V:
        wb = jnp.pad(wb, ((0, Vp - V), (0, 0)))
    if Mp != M:
        pos2 = jnp.pad(pos2, ((0, Mp - M), (0, 0)))

    out = pl.pallas_call(
        _soft_embed_kernel,
        out_shape=jax.ShapeDtypeStruct((Mp, D), jnp.float32),
        grid_spec=pltpu.PrefetchScalarGridSpec(
            num_scalar_prefetch=0,
            grid=(Mp // tm, Vp // tk),
            in_specs=[
                pl.BlockSpec((tm, tk), lambda i, k: (i, k)),     # soft-token block
                pl.BlockSpec((tk, D), lambda i, k: (k, 0)),      # weight K-tile
                pl.BlockSpec((tm, 1), lambda i, k: (i, 0)),      # position ids
                _single_buffered_spec((L, D), lambda i, k: (0, 0)),  # pos table
            ],
            out_specs=pl.BlockSpec((tm, D), lambda i, k: (i, 0)),
            scratch_shapes=[pltpu.VMEM((tm, D), jnp.float32)],
        ),
        compiler_params=pltpu.CompilerParams(
            dimension_semantics=("parallel", "arbitrary"),
            vmem_limit_bytes=_vmem_limit_bytes(),
        ),
    )(xb, wb, pos2, p)
    return out[:M]


# ----------------------------- module --------------------------------------- #
class EmbeddingLayer:
    """JAX/Pallas port of the PyTorch EmbeddingLayer (learned positional
    embeddings).  Weights use deterministic xavier-uniform init.
    TODO(synk): pretrained-embedding loading (vocab.vectors) is external I/O
    and is intentionally not reproduced here."""

    def __init__(self, vocab_size, d_model, max_length, key):
        k_tok, k_pos = jax.random.split(key)
        a_tok = math.sqrt(6.0 / (vocab_size + d_model))
        a_pos = math.sqrt(6.0 / (max_length + d_model))
        self.token_embed = jax.random.uniform(
            k_tok, (vocab_size, d_model), jnp.float32, -a_tok, a_tok)
        self.pos_embed = jax.random.uniform(
            k_pos, (max_length, d_model), jnp.float32, -a_pos, a_pos)
        self.vocab_size = vocab_size
        self.d_model = d_model

    def __call__(self, x, pos):
        if x.ndim == 2:
            B, S = x.shape
            pos_b = jnp.broadcast_to(pos, (B, S)).astype(jnp.int32)
            y = _embed_ids(
                x.reshape(-1).astype(jnp.int32),
                pos_b.reshape(-1),
                self.token_embed,
                self.pos_embed,
            )
            return y.reshape(B, S, self.d_model)
        else:
            B, S, V = x.shape
            assert V == self.vocab_size
            pos_b = jnp.broadcast_to(pos, (B, S)).astype(jnp.int32)
            y = _soft_embed(
                x.reshape(B * S, V).astype(jnp.float32),
                pos_b.reshape(-1),
                self.token_embed,
                self.pos_embed,
            )
            return y.reshape(B, S, self.d_model)


# ----------------------------- demo ------------------------------------------ #
if __name__ == "__main__":
    key = jax.random.PRNGKey(0)
    k_params, k_tok, k_soft = jax.random.split(key, 3)

    vocab_size, d_model, max_length = 32, 32, 16
    B, S = 2, 8

    layer = EmbeddingLayer(vocab_size, d_model, max_length, k_params)

    # path A: 2-D integer token ids
    tok = jax.random.randint(k_tok, (B, S), 0, vocab_size, dtype=jnp.int32)
    pos = jnp.broadcast_to(jnp.arange(S, dtype=jnp.int32), (B, S))
    ref_a = layer.token_embed[tok] + layer.pos_embed[pos]

    # (a) tiny-table one-hot fast path (auto-routed)
    y_a = layer(tok, pos)
    jax.block_until_ready(y_a)
    assert y_a.shape == (B, S, d_model)
    assert jnp.allclose(y_a, ref_a, atol=1e-5, rtol=1e-5), "path A (one-hot) mismatch"

    # (b) scalable HBM DMA row-gather path (forced, to exercise that kernel)
    y_g = _embed_ids(tok.reshape(-1), pos.reshape(-1),
                     layer.token_embed, layer.pos_embed,
                     force_gather=True).reshape(B, S, d_model)
    jax.block_until_ready(y_g)
    assert jnp.allclose(y_g, ref_a, atol=1e-5, rtol=1e-5), "path A (gather) mismatch"

    # path B: 3-D soft token distributions (bf16 operands, f32 accumulate)
    x_soft = jax.nn.softmax(
        jax.random.normal(k_soft, (B, S, vocab_size), jnp.float32), axis=-1)
    y_b = layer(x_soft, pos)
    jax.block_until_ready(y_b)
    ref_b = jnp.einsum("bsv,vd->bsd", x_soft, layer.token_embed) + layer.pos_embed[pos]
    assert y_b.shape == (B, S, d_model)
    assert jnp.allclose(y_b, ref_b, atol=1e-2, rtol=1e-2), "path B mismatch"

    print("KERNEL_OK")
</pallas_src>

<mosaic_0001>
module attributes {stable_mosaic.version = 11 : i64} {
  func.func @_embed_ids_onehot_kernel(%arg0: i32, %arg1: memref<8x1xi32, #tpu.memory_space<vmem>>, %arg2: memref<8x1xi32, #tpu.memory_space<vmem>>, %arg3: memref<32x32xf32, #tpu.memory_space<vmem>>, %arg4: memref<16x32xf32, #tpu.memory_space<vmem>>, %arg5: memref<8x32xf32, #tpu.memory_space<vmem>>) attributes {dimension_semantics = [#tpu.dimension_semantics<parallel>], iteration_bounds = array<i64: 2>, scalar_prefetch = 0 : i64, scratch_operands = 0 : i64, tpu.core_type = #tpu.core_type<tc>, window_params = [{transform_indices = @transform_0, window_bounds = array<i64: 8, 1>}, {transform_indices = @transform_1, window_bounds = array<i64: 8, 1>}, {pipeline_mode = #tpu.pipeline_mode<synchronous>, transform_indices = @transform_2, window_bounds = array<i64: 32, 32>}, {pipeline_mode = #tpu.pipeline_mode<synchronous>, transform_indices = @transform_3, window_bounds = array<i64: 16, 32>}, {transform_indices = @transform_4, window_bounds = array<i64: 8, 32>}]} {
    %c0 = arith.constant 0 : index
    %c0_0 = arith.constant 0 : index
    %0 = vector.load %arg1[%c0, %c0_0] : memref<8x1xi32, #tpu.memory_space<vmem>>, vector<8x1xi32>
    %1 = tpu.iota {dimensions = array<i32: 1>} : vector<8x32xi32>
    %2 = vector.broadcast %0 : vector<8x1xi32> to vector<8x32xi32>
    %3 = arith.cmpi eq, %2, %1 : vector<8x32xi32>
    %4 = arith.extui %3 : vector<8x32xi1> to vector<8x32xi32>
    %5 = arith.sitofp %4 : vector<8x32xi32> to vector<8x32xf32>
    %c0_1 = arith.constant 0 : index
    %c0_2 = arith.constant 0 : index
    %6 = vector.load %arg2[%c0_1, %c0_2] : memref<8x1xi32, #tpu.memory_space<vmem>>, vector<8x1xi32>
    %7 = tpu.iota {dimensions = array<i32: 1>} : vector<8x16xi32>
    %8 = vector.broadcast %6 : vector<8x1xi32> to vector<8x16xi32>
    %9 = arith.cmpi eq, %8, %7 : vector<8x16xi32>
    %10 = arith.extui %9 : vector<8x16xi1> to vector<8x16xi32>
    %11 = arith.sitofp %10 : vector<8x16xi32> to vector<8x16xf32>
    %c0_3 = arith.constant 0 : index
    %c0_4 = arith.constant 0 : index
    %12 = vector.load %arg3[%c0_3, %c0_4] : memref<32x32xf32, #tpu.memory_space<vmem>>, vector<32x32xf32>
    %cst = arith.constant dense<0.000000e+00> : vector<8x32xf32>
    %13 = tpu.matmul %5, %12, %cst {dimension_numbers = #tpu.dot_dimension_numbers<[1], [0], [0], [1], [0, 0, 1, 1], [], []>} : vector<8x32xf32>, vector<32x32xf32>, vector<8x32xf32> -> vector<8x32xf32>
    %c0_5 = arith.constant 0 : index
    %c0_6 = arith.constant 0 : index
    %14 = vector.load %arg4[%c0_5, %c0_6] : memref<16x32xf32, #tpu.memory_space<vmem>>, vector<16x32xf32>
    %cst_7 = arith.constant dense<0.000000e+00> : vector<8x32xf32>
    %15 = tpu.matmul %11, %14, %cst_7 {dimension_numbers = #tpu.dot_dimension_numbers<[1], [0], [0], [1], [0, 0, 1, 1], [], []>} : vector<8x16xf32>, vector<16x32xf32>, vector<8x32xf32> -> vector<8x32xf32>
    %16 = arith.addf %13, %15 : vector<8x32xf32>
    %c0_8 = arith.constant 0 : index
    %c0_9 = arith.constant 0 : index
    %17 = vector.load %arg5[%c0_8, %c0_9] : memref<8x32xf32, #tpu.memory_space<vmem>>, vector<8x32xf32>
    tpu.vector_store %arg5[%c0_8, %c0_9], %16 {strides = array<i32>} : memref<8x32xf32, #tpu.memory_space<vmem>>, vector<8x32xf32>,
    return
  }
  func.func @transform_0(%arg0: i32) -> (i32, i32) {
    %c0_i32 = arith.constant 0 : i32
    %c0_i32_0 = arith.constant 0 : i32
    return %arg0, %c0_i32 : i32, i32
  }
  func.func @transform_1(%arg0: i32) -> (i32, i32) {
    %c0_i32 = arith.constant 0 : i32
    %c0_i32_0 = arith.constant 0 : i32
    return %arg0, %c0_i32 : i32, i32
  }
  func.func @transform_2(%arg0: i32) -> (i32, i32) {
    %c0_i32 = arith.constant 0 : i32
    %c0_i32_0 = arith.constant 0 : i32
    %c0_i32_1 = arith.constant 0 : i32
    return %c0_i32, %c0_i32_0 : i32, i32
  }
  func.func @transform_3(%arg0: i32) -> (i32, i32) {
    %c0_i32 = arith.constant 0 : i32
    %c0_i32_0 = arith.constant 0 : i32
    %c0_i32_1 = arith.constant 0 : i32
    return %c0_i32, %c0_i32_0 : i32, i32
  }
  func.func @transform_4(%arg0: i32) -> (i32, i32) {
    %c0_i32 = arith.constant 0 : i32
    %c0_i32_0 = arith.constant 0 : i32
    return %arg0, %c0_i32 : i32, i32
  }
}

</mosaic_0001>

<llo_original>
// kernel: tpu_custom_call.1
$region0: #{tpu_custom_call.1}
  #allocation0 [shape = 'u32[]', space=smem, size = 0x4, offset = 0x4, fixed_abs, tag = 'smem constant byte address 0x4 - core index']
  #allocation1 [shape = 'u32[144,128]{1,0:T(1,128)}', space=vmem, size = 0x12000, scoped, tag = 'internal scratch']
  %s0 = inlined_call_operand.vmem [shape: s32[16,1], index: 0, kind: input, shape index: {}]
  %s1 = inlined_call_operand.vmem [shape: s32[16,1], index: 1, kind: input, shape index: {}]
  %s2 = inlined_call_operand.vmem [shape: f32[32,32], index: 2, kind: input, shape index: {}]
  %s3 = inlined_call_operand.hbm [shape: f32[16,32], index: 3, kind: input, shape index: {}]
  %s4 = inlined_call_operand.hbm [shape: f32[16,32], index: 4, kind: output, shape index: {}]
  %s5 = sld [smem:[#allocation0]]
  $region53: #{tpu_custom_call.1} parent=0
    _
  %s7 = ssub.s32 1, %s5
  %s8 = scalar_select 0, %s7, %s5
  $region1: #{tpu_custom_call.1} parent=0
    #allocation2 [shape = 'u8[8192]{0}', space=vmem, size = 0x2000, scoped, tag = 'input window, operand 3, single buffered']
    #allocation3 [shape = 's32[2]{0}', space=sflag, size = 0x8, scoped, tag = 'scoped memory for tpu_custom_call.1']
    #allocation4 [shape = 's32[2]{0}', space=sflag, size = 0x8, scoped, tag = 'scoped memory for tpu_custom_call.1']
    #allocation5 [shape = 'u8[8192]{0}', space=vmem, size = 0x2000, scoped, tag = 'output window, operand 0']
    %9 = vsyncpa [#allocation3], 0
    %10 = vsyncpa [#allocation4], 0
    %s11 = scalar_lea.sflag [#allocation4], 1
    %12 = vsyncpa %s11, 0
    loop: start=0, step=1, limit=4
    $region2: #{tpu_custom_call.1} parent=1 // loop_pre_header
      _
    $region3: #{tpu_custom_call.1} parent=1 // loop_header
      %s14 = sphi 0, %s18
      %p15 = scmp.ge.s32.totalorder %s14, 4
      %s24 = sphi 0, %s26
      %s27 = sphi 0, %s24
      %s28 = sphi 0, %s27
      %s44 = sphi 0, %s28
      %s50 = sphi 0, %s52
      %s53 = sphi 0, %s50
      %s54 = sphi 0, %s53
      %s70 = sphi 0, %s54
      %s74 = sphi 0, %s74
      %s76 = sphi 0, %s74
      %s77 = sphi 0, %s76
      %s91 = sphi 0, %s77
      %s95 = sphi 0, %s95
      %s97 = sphi 0, %s95
      %s98 = sphi 0, %s97
      %s112 = sphi 0, %s98
      %s118 = sphi 0, %s120
      %s121 = sphi 0, %s118
      %s122 = sphi 0, %s121
      %s138 = sphi 0, %s122
    $region4: #{tpu_custom_call.1} parent=1 // loop_header_branch
      %17 = sbr.rel (%p15) target = $region8
    $region5: #{tpu_custom_call.1} parent=1 // loop_body
      %s19 = ssub.s32 %s14, 1
      %s20 = ssub.s32 %s14, 2
      %s21 = sadd.s32 %s14, 1
      %s22 = ssub.s32 %s14, %s21
      %p23 = scmp.eq.s32.totalorder %s22, 0
      %s25 = sadd.s32 %s24, 1
      %s26 = scalar_select %p23, %s24, %s25
      %p29 = pneg %p23
      %p30 = scmp.eq.s32.totalorder %s14, 1
      %p31 = por %p29, %p30
      %p32 = scmp.ne.s32.totalorder %s24, %s27
      %p33 = scmp.eq.s32.totalorder %s14, 0
      %p34 = por %p32, %p33
      %p35 = scmp.ne.s32.totalorder %s24, %s27
      %p36 = scmp.eq.s32.totalorder %s19, 1
      %p37 = por %p35, %p36
      %p38 = scmp.ne.s32.totalorder %s27, %s28
      %p39 = scmp.eq.s32.totalorder %s19, 0
      %p40 = por %p38, %p39
      %p41 = scmp.ne.s32.totalorder %s27, %s28
      %p42 = scmp.eq.s32.totalorder %s20, 1
      %p43 = por %p41, %p42
      %p45 = scmp.ne.s32.totalorder %s28, %s44
      %p46 = scmp.eq.s32.totalorder %s20, 0
      %p47 = por %p45, %p46
      %s48 = ssub.s32 %s14, %s21
      %p49 = scmp.eq.s32.totalorder %s48, 0
      %s51 = sadd.s32 %s50, 1
      %s52 = scalar_select %p49, %s50, %s51
      %p55 = pneg %p49
      %p56 = scmp.eq.s32.totalorder %s14, 1
      %p57 = por %p55, %p56
      %p58 = scmp.ne.s32.totalorder %s50, %s53
      %p59 = scmp.eq.s32.totalorder %s14, 0
      %p60 = por %p58, %p59
      %p61 = scmp.ne.s32.totalorder %s50, %s53
      %p62 = scmp.eq.s32.totalorder %s19, 1
      %p63 = por %p61, %p62
      %p64 = scmp.ne.s32.totalorder %s53, %s54
      %p65 = scmp.eq.s32.totalorder %s19, 0
      %p66 = por %p64, %p65
      %p67 = scmp.ne.s32.totalorder %s53, %s54
      %p68 = scmp.eq.s32.totalorder %s20, 1
      %p69 = por %p67, %p68
      %p71 = scmp.ne.s32.totalorder %s54, %s70
      %p72 = scmp.eq.s32.totalorder %s20, 0
      %p73 = por %p71, %p72
      %s75 = sadd.s32 %s74, 1
      %p78 = scmp.eq.s32.totalorder %s14, 1
      %p79 = scmp.ne.s32.totalorder %s74, %s76
      %p80 = scmp.eq.s32.totalorder %s14, 0
      %p81 = por %p79, %p80
      %p82 = scmp.ne.s32.totalorder %s74, %s76
      %p83 = scmp.eq.s32.totalorder %s19, 1
      %p84 = por %p82, %p83
      %p85 = scmp.ne.s32.totalorder %s76, %s77
      %p86 = scmp.eq.s32.totalorder %s19, 0
      %p87 = por %p85, %p86
      %p88 = scmp.ne.s32.totalorder %s76, %s77
      %p89 = scmp.eq.s32.totalorder %s20, 1
      %p90 = por %p88, %p89
      %p92 = scmp.ne.s32.totalorder %s77, %s91
      %p93 = scmp.eq.s32.totalorder %s20, 0
      %p94 = por %p92, %p93
      %s96 = sadd.s32 %s95, 1
      %p99 = scmp.eq.s32.totalorder %s14, 1
      %p100 = scmp.ne.s32.totalorder %s95, %s97
      %p101 = scmp.eq.s32.totalorder %s14, 0
      %p102 = por %p100, %p101
      %p103 = scmp.ne.s32.totalorder %s95, %s97
      %p104 = scmp.eq.s32.totalorder %s19, 1
      %p105 = por %p103, %p104
      %p106 = scmp.ne.s32.totalorder %s97, %s98
      %p107 = scmp.eq.s32.totalorder %s19, 0
      %p108 = por %p106, %p107
      %p109 = scmp.ne.s32.totalorder %s97, %s98
      %p110 = scmp.eq.s32.totalorder %s20, 1
      %p111 = por %p109, %p110
      %p113 = scmp.ne.s32.totalorder %s98, %s112
      %p114 = scmp.eq.s32.totalorder %s20, 0
      %p115 = por %p113, %p114
      %s116 = ssub.s32 %s14, %s21
      %p117 = scmp.eq.s32.totalorder %s116, 0
      %s119 = sadd.s32 %s118, 1
      %s120 = scalar_select %p117, %s118, %s119
      %p123 = pneg %p117
      %p124 = scmp.eq.s32.totalorder %s14, 1
      %p125 = por %p123, %p124
      %p126 = scmp.ne.s32.totalorder %s118, %s121
      %p127 = scmp.eq.s32.totalorder %s14, 0
      %p128 = por %p126, %p127
      %p129 = scmp.ne.s32.totalorder %s118, %s121
      %p130 = scmp.eq.s32.totalorder %s19, 1
      %p131 = por %p129, %p130
      %p132 = scmp.ne.s32.totalorder %s121, %s122
      %p133 = scmp.eq.s32.totalorder %s19, 0
      %p134 = por %p132, %p133
      %p135 = scmp.ne.s32.totalorder %s121, %s122
      %p136 = scmp.eq.s32.totalorder %s20, 1
      %p137 = por %p135, %p136
      %p139 = scmp.ne.s32.totalorder %s122, %s138
      %p140 = scmp.eq.s32.totalorder %s20, 0
      %p141 = por %p139, %p140
      %p142 = scmp.le.s32.totalorder 1, %s14
      %p143 = scmp.lt.s32.totalorder %s14, 3
      %p144 = pnand %p142, %p143
      %p145 = pneg %p144
      // Predicated region
      $region9: #{tpu_custom_call.1} parent=5 // pred_check
        _
      $region10: #{tpu_custom_call.1} parent=5 // pred_check_branch
        %147 = sbr.rel (%p144) target = $region12
      $region11: #{tpu_custom_call.1} parent=5 // pred_region
        %s148 = ssub.s32 %s14, 1
        // Predicated region
        $region13: #{tpu_custom_call.1} parent=11 // pred_check
          %p149 = pneg %p87
        $region14: #{tpu_custom_call.1} parent=11 // pred_check_branch
          %151 = sbr.rel (%p149) target = $region16
        $region15: #{tpu_custom_call.1} parent=11 // pred_region
          _
        $region16: #{tpu_custom_call.1} parent=11 // pred_fallthru
          _
        // Predicated region
        $region17: #{tpu_custom_call.1} parent=11 // pred_check
          %p152 = pneg %p108
        $region18: #{tpu_custom_call.1} parent=11 // pred_check_branch
          %154 = sbr.rel (%p152) target = $region20
        $region19: #{tpu_custom_call.1} parent=11 // pred_region
          %s156 = ssub.s32 256, 256
          %157 = vsyncadd [#allocation3], %s156
          %s158 = sshll.u32 [#allocation2], 4
          %s159 = int_to_ptr.vmem [resolvable:$true] %s158
          %164 = dma.hbm_to_vmem [thread:$0]  %s3, 256, %s159, [#allocation3], 128, 128, 8
        $region20: #{tpu_custom_call.1} parent=11 // pred_fallthru
          _
      $region12: #{tpu_custom_call.1} parent=5 // pred_fallthru
        _
      %p165 = scmp.lt.s32.totalorder %s14, 2
      // Predicated region
      $region21: #{tpu_custom_call.1} parent=5 // pred_check
        %p166 = pneg %p165
      $region22: #{tpu_custom_call.1} parent=5 // pred_check_branch
        %168 = sbr.rel (%p166) target = $region24
      $region23: #{tpu_custom_call.1} parent=5 // pred_region
        // Predicated region
        $region25: #{tpu_custom_call.1} parent=23 // pred_check
          %p169 = pneg %p34
        $region26: #{tpu_custom_call.1} parent=23 // pred_check_branch
          %171 = sbr.rel (%p169) target = $region28
        $region27: #{tpu_custom_call.1} parent=23 // pred_region
          %p172 = scmp.lt.s32.totalorder %s14, 1
          %s173 = scalar_select %p172, %s14, 1
          %s174 = smul.addr %s173, 8
          %s175 = scalar_lea.vmem %s0, %s174
        $region28: #{tpu_custom_call.1} parent=23 // pred_fallthru
          _
        // Predicated region
        $region29: #{tpu_custom_call.1} parent=23 // pred_check
          %p176 = pneg %p60
        $region30: #{tpu_custom_call.1} parent=23 // pred_check_branch
          %178 = sbr.rel (%p176) target = $region32
        $region31: #{tpu_custom_call.1} parent=23 // pred_region
          %p179 = scmp.lt.s32.totalorder %s14, 1
          %s180 = scalar_select %p179, %s14, 1
          %s181 = smul.addr %s180, 8
          %s182 = scalar_lea.vmem %s1, %s181
        $region32: #{tpu_custom_call.1} parent=23 // pred_fallthru
          _
      $region24: #{tpu_custom_call.1} parent=5 // pred_fallthru
        _
      %p183 = scmp.le.s32.totalorder 1, %s14
      %p184 = scmp.lt.s32.totalorder %s14, 3
      %p185 = pnand %p183, %p184
      %p186 = pneg %p185
      // Predicated region
      $region33: #{tpu_custom_call.1} parent=5 // pred_check
        _
      $region34: #{tpu_custom_call.1} parent=5 // pred_check_branch
        %188 = sbr.rel (%p185) target = $region36
      $region35: #{tpu_custom_call.1} parent=5 // pred_region
        %s189 = ssub.s32 %s14, 1
        // Predicated region
        $region37: #{tpu_custom_call.1} parent=35 // pred_check
          %p190 = pneg %p108
        $region38: #{tpu_custom_call.1} parent=35 // pred_check_branch
          %192 = sbr.rel (%p190) target = $region40
        $region39: #{tpu_custom_call.1} parent=35 // pred_region
          %193 = dma.done [#allocation3], 256
        $region40: #{tpu_custom_call.1} parent=35 // pred_fallthru
          _
        %p194 = scmp.lt.s32.totalorder %s19, 1
        %s195 = scalar_select %p194, %s19, 1
        %s196 = smul.addr %s195, 8
        %s197 = scalar_lea.vmem %s0, %s196
        %p198 = pneg %p40
        %p199 = pneg %p37
        %p200 = scmp.lt.s32.totalorder %s19, 1
        %s201 = scalar_select %p200, %s19, 1
        %s202 = smul.addr %s201, 8
        %s203 = scalar_lea.vmem %s1, %s202
        %p204 = pneg %p66
        %p205 = pneg %p63
        %p206 = pneg %p87
        %p207 = pneg %p84
        %p208 = pneg %p108
        %p209 = pneg %p105
        %p210 = pneg %p134
        %p211 = pneg %p131
        %s212 = sand.u32 %s121, 1
        %s213 = scalar_lea.sflag [#allocation4], %s212
        %s214 = sand.u32 %s121, 1
        %s215 = smul.addr %s214, 8
        %s216 = scalar_lea.vmem [#allocation5], %s215
        %p217 = scmp.lt.s32.totalorder %s19, 1
        %s218 = scalar_select %p217, %s19, 1
        %s219 = smul.addr %s218, 8
        %s220 = scalar_lea.vmem %s0, %s219
        %p221 = scmp.lt.s32.totalorder %s19, 1
        %s222 = scalar_select %p221, %s19, 1
        %s223 = smul.addr %s222, 8
        %s224 = scalar_lea.vmem %s1, %s223
        %v225 = vld [vmem:[%s220] sm:$0xff]
        %v226 = vlaneseq
        %v227 = vand.u32 %v226, 127
        %228 = vset.pattern.permute.xlu0 0
        %229 = vperm.xlu0 %228, %v225
        %v230 = vpop.permute.xlu0 %229
        %vm231 = vcmp.eq.s32.totalorder %v230, %v227
        %v232 = vsel %vm231, 1, 0
        %v233 = vcvt.s32.f32 %v232
        %v234 = vld [vmem:[%s224] sm:$0xff]
        %235 = vset.pattern.permute.xlu0 0
        %236 = vperm.xlu0 %235, %v234
        %v237 = vpop.permute.xlu0 %236
        %vm238 = vcmp.eq.s32.totalorder %v237, %v227
        %v239 = vsel %vm238, 1, 0
        %v240 = vcvt.s32.f32 %v239
        %v241 = vld [vmem:[%s2] sm:$0xff]
        %v242 = vld [vmem:[%s2 + $0x8] sm:$0xff]
        %v243 = vld [vmem:[%s2 + $0x10] sm:$0xff]
        %v244 = vld [vmem:[%s2 + $0x18] sm:$0xff]
        %v245 = vld [vmem:[#allocation2] sm:$0xff]
        %v246 = vld [vmem:[#allocation2 + $0x8] sm:$0xff]
        %vm247 = vcmask 130048
        %v249 = vsel %vm247, %v240, 0
        %251 = vmatprep.subr.mxu0 0.0
        %252 = vmatpush1.msra.mxu0 %v245
        %253 = vmatprep.subr.mxu0 0.0
        %254 = vmatpush1.msra.mxu0 %v246
        %255 = vmatprep.subr.mxu0 0.0
        %256 = vmatpush1.msra.mxu0 0.0
        %257 = vmatprep.subr.mxu0 0.0
        %258 = vmatpush1.msra.mxu0 0.0
        %259 = vmatprep.subr.mxu0 0.0
        %260 = vmatpush1.msra.mxu0 0.0
        %261 = vmatprep.subr.mxu0 0.0
        %262 = vmatpush1.msra.mxu0 0.0
        %263 = vmatprep.subr.mxu0 0.0
        %264 = vmatpush1.msra.mxu0 0.0
        %265 = vmatprep.subr.mxu0 0.0
        %266 = vmatpush1.msra.mxu0 0.0
        %267 = vmatprep.subr.mxu0 0.0
        %268 = vmatpush1.msra.mxu0 0.0
        %269 = vmatprep.subr.mxu0 0.0
        %270 = vmatpush1.msra.mxu0 0.0
        %271 = vmatprep.subr.mxu0 0.0
        %272 = vmatpush1.msra.mxu0 0.0
        %273 = vmatprep.subr.mxu0 0.0
        %274 = vmatpush1.msra.mxu0 0.0
        %275 = vmatprep.subr.mxu0 0.0
        %276 = vmatpush1.msra.mxu0 0.0
        %277 = vmatprep.subr.mxu0 0.0
        %278 = vmatpush1.msra.mxu0 0.0
        %279 = vmatprep.subr.mxu0 0.0
        %280 = vmatpush1.msra.mxu0 0.0
        %281 = vmatprep.subr.mxu0 0.0
        %282 = vmatpush1.msra.mxu0 0.0
        %283 = vmatprep.subr.mxu0 0.0
        %284 = vmatpush1.msra.mxu0 0.0
        %285 = vmatprep.subr.mxu0 0.0
        %286 = vmatpush1.msra.mxu0 0.0
        %287 = vmatprep.subr.mxu0 0.0
        %288 = vmatpush1.msra.mxu0 0.0
        %289 = vmatprep.subr.mxu0 0.0
        %290 = vmatpush1.msra.mxu0 0.0
        %291 = vmatprep.subr.mxu0 0.0
        %292 = vmatpush1.msra.mxu0 0.0
        %293 = vmatprep.subr.mxu0 0.0
        %294 = vmatpush1.msra.mxu0 0.0
        %295 = vmatprep.subr.mxu0 0.0
        %296 = vmatpush1.msra.mxu0 0.0
        %297 = vmatprep.subr.mxu0 0.0
        %298 = vmatpush1.msra.mxu0 0.0
        %299 = vmatprep.subr.mxu0 0.0
        %300 = vmatpush1.msra.mxu0 0.0
        %301 = vmatprep.subr.mxu0 0.0
        %302 = vmatpush1.msra.mxu0 0.0
        %303 = vmatprep.subr.mxu0 0.0
        %304 = vmatpush1.msra.mxu0 0.0
        %305 = vmatprep.subr.mxu0 0.0
        %306 = vmatpush1.msra.mxu0 0.0
        %307 = vmatprep.subr.mxu0 0.0
        %308 = vmatpush1.msra.mxu0 0.0
        %309 = vmatprep.subr.mxu0 0.0
        %310 = vmatpush1.msra.mxu0 0.0
        %311 = vmatprep.subr.mxu0 0.0
        %312 = vmatpush1.msra.mxu0 0.0
        %313 = vmatprep.subr.mxu0 0.0
        %314 = vmatpush1.msra.mxu0 0.0
        %315 = vmatprep.mubr.f32.mxu0 0.0
        %316 = vmatmul.mubr.f32.gmra.mrb[0].mxu0 %v249
        %v317 = vpop.f32.mrb[0].mxu0
        %v318 = vadd.f32 0.0, %v317
        %v319 = vpop.f32.mrb[0].mxu0
        %320 = vdwg.mxu0
        %vm321 = vcmask 261120
        %v323 = vsel %vm321, %v233, 0
        %325 = vmatprep.subr.mxu0 0.0
        %326 = vmatpush1.msra.mxu0 %v241
        %327 = vmatprep.subr.mxu0 0.0
        %328 = vmatpush1.msra.mxu0 %v242
        %329 = vmatprep.subr.mxu0 0.0
        %330 = vmatpush1.msra.mxu0 %v243
        %331 = vmatprep.subr.mxu0 0.0
        %332 = vmatpush1.msra.mxu0 %v244
        %333 = vmatprep.subr.mxu0 0.0
        %334 = vmatpush1.msra.mxu0 0.0
        %335 = vmatprep.subr.mxu0 0.0
        %336 = vmatpush1.msra.mxu0 0.0
        %337 = vmatprep.subr.mxu0 0.0
        %338 = vmatpush1.msra.mxu0 0.0
        %339 = vmatprep.subr.mxu0 0.0
        %340 = vmatpush1.msra.mxu0 0.0
        %341 = vmatprep.subr.mxu0 0.0
        %342 = vmatpush1.msra.mxu0 0.0
        %343 = vmatprep.subr.mxu0 0.0
        %344 = vmatpush1.msra.mxu0 0.0
        %345 = vmatprep.subr.mxu0 0.0
        %346 = vmatpush1.msra.mxu0 0.0
        %347 = vmatprep.subr.mxu0 0.0
        %348 = vmatpush1.msra.mxu0 0.0
        %349 = vmatprep.subr.mxu0 0.0
        %350 = vmatpush1.msra.mxu0 0.0
        %351 = vmatprep.subr.mxu0 0.0
        %352 = vmatpush1.msra.mxu0 0.0
        %353 = vmatprep.subr.mxu0 0.0
        %354 = vmatpush1.msra.mxu0 0.0
        %355 = vmatprep.subr.mxu0 0.0
        %356 = vmatpush1.msra.mxu0 0.0
        %357 = vmatprep.subr.mxu0 0.0
        %358 = vmatpush1.msra.mxu0 0.0
        %359 = vmatprep.subr.mxu0 0.0
        %360 = vmatpush1.msra.mxu0 0.0
        %361 = vmatprep.subr.mxu0 0.0
        %362 = vmatpush1.msra.mxu0 0.0
        %363 = vmatprep.subr.mxu0 0.0
        %364 = vmatpush1.msra.mxu0 0.0
        %365 = vmatprep.subr.mxu0 0.0
        %366 = vmatpush1.msra.mxu0 0.0
        %367 = vmatprep.subr.mxu0 0.0
        %368 = vmatpush1.msra.mxu0 0.0
        %369 = vmatprep.subr.mxu0 0.0
        %370 = vmatpush1.msra.mxu0 0.0
        %371 = vmatprep.subr.mxu0 0.0
        %372 = vmatpush1.msra.mxu0 0.0
        %373 = vmatprep.subr.mxu0 0.0
        %374 = vmatpush1.msra.mxu0 0.0
        %375 = vmatprep.subr.mxu0 0.0
        %376 = vmatpush1.msra.mxu0 0.0
        %377 = vmatprep.subr.mxu0 0.0
        %378 = vmatpush1.msra.mxu0 0.0
        %379 = vmatprep.subr.mxu0 0.0
        %380 = vmatpush1.msra.mxu0 0.0
        %381 = vmatprep.subr.mxu0 0.0
        %382 = vmatpush1.msra.mxu0 0.0
        %383 = vmatprep.subr.mxu0 0.0
        %384 = vmatpush1.msra.mxu0 0.0
        %385 = vmatprep.subr.mxu0 0.0
        %386 = vmatpush1.msra.mxu0 0.0
        %387 = vmatprep.subr.mxu0 0.0
        %388 = vmatpush1.msra.mxu0 0.0
        %389 = vmatprep.mubr.f32.mxu0 0.0
        %390 = vmatmul.mubr.f32.gmra.mrb[0].mxu0 %v323
        %v391 = vpop.f32.mrb[0].mxu0
        %v392 = vadd.f32 %v318, %v391
        %v393 = vpop.f32.mrb[0].mxu0
        %394 = vdwg.mxu0
        %395 = vst.msk [vmem:[%s216] sm:$0xff] %vm321, %v392
        %s396 = sand.u32 %s121, 1
        %s397 = scalar_lea.sflag [#allocation4], %s396
        %s398 = sand.u32 %s121, 1
        %s399 = smul.addr %s398, 8
        %s400 = scalar_lea.vmem [#allocation5], %s399
        // Predicated region
        $region41: #{tpu_custom_call.1} parent=35 // pred_check
          %p401 = pneg %p131
        $region42: #{tpu_custom_call.1} parent=35 // pred_check_branch
          %403 = sbr.rel (%p401) target = $region44
        $region43: #{tpu_custom_call.1} parent=35 // pred_region
          %s405 = ssub.s32 128, 128
          %406 = vsyncadd %s397, %s405
          %s407 = smul.addr %s19, 128
          %s408 = scalar_lea.hbm %s4, %s407
          %s410 = sshll.u32 %s400, 4
          %s411 = int_to_ptr.vmem [resolvable:$true] %s410
          %413 = dma.vmem_to_hbm [thread:$0]  %s411, 128, %s408, %s397
        $region44: #{tpu_custom_call.1} parent=35 // pred_fallthru
          _
      $region36: #{tpu_custom_call.1} parent=5 // pred_fallthru
        _
      %p414 = scmp.le.s32.totalorder 2, %s14
      // Predicated region
      $region45: #{tpu_custom_call.1} parent=5 // pred_check
        %p415 = pneg %p414
      $region46: #{tpu_custom_call.1} parent=5 // pred_check_branch
        %417 = sbr.rel (%p415) target = $region48
      $region47: #{tpu_custom_call.1} parent=5 // pred_region
        %s418 = ssub.s32 %s14, 2
        // Predicated region
        $region49: #{tpu_custom_call.1} parent=47 // pred_check
          %p419 = pneg %p137
        $region50: #{tpu_custom_call.1} parent=47 // pred_check_branch
          %421 = sbr.rel (%p419) target = $region52
        $region51: #{tpu_custom_call.1} parent=47 // pred_region
          %s422 = sand.u32 %s122, 1
          %s423 = scalar_lea.sflag [#allocation4], %s422
          %s424 = sand.u32 %s122, 1
          %s425 = smul.addr %s424, 8
          %s426 = scalar_lea.vmem [#allocation5], %s425
          %427 = dma.done %s423, 128
        $region52: #{tpu_custom_call.1} parent=47 // pred_fallthru
          _
      $region48: #{tpu_custom_call.1} parent=5 // pred_fallthru
        _
    $region6: #{tpu_custom_call.1} parent=1 // loop_footer
      %s18 = sadd.s32 1, %s14
    $region7: #{tpu_custom_call.1} parent=1 // loop_footer_branch
      %13 = sbr.rel target = $region3
    $region8: #{tpu_custom_call.1} parent=1 // loop_exit
      _
    %428 = vsyncpa [#allocation3], 1
    %s429 = scalar_lea.sflag [#allocation3], 1
    %430 = vsyncpa %s429, 1
    %431 = vsyncpa [#allocation4], 1
    %s432 = scalar_lea.sflag [#allocation4], 1
    %433 = vsyncpa %s432, 1

</llo_original>
